<compile_context>
chip_gen: v7x
topology: tpu7x:2x2x1
jax: 0.10.0
libtpu: 0.0.40
codegen_flags: <defaults>
</compile_context>

<pallas_src>
import jax
import jax.numpy as jnp
import numpy as np
from jax import lax
from jax.experimental import pallas as pl
from jax.experimental.pallas import tpu as pltpu


def _round_up(x, m):
    return ((x + m - 1) // m) * m


def _pick_cout_tile(cout, cap=256):
    """Largest divisor of cout that is <= cap and a multiple of 8 (or cout itself)."""
    if cout <= cap:
        return cout
    for t in range(cap, 0, -8):
        if t % 8 == 0 and cout % t == 0:
            return t
    return cout


def _vmem_limit_bytes(needed):
    """Generation-aware VMEM limit: actual block bytes + headroom, capped at 90% of physical."""
    phys = 64 * 1024 * 1024          # v7x floor; v5e/v6e have 128 MiB physical
    try:
        phys = int(pltpu.get_tpu_info().vmem_capacity_bytes)
    except Exception:
        pass
    want = max(2 * needed + (4 << 20), 16 << 20)
    return int(min(want, (phys * 9) // 10))


def _make_conv_bn_act_kernel(k, stride, Wp, H_out, Cin_p):
    OW = H_out * Wp  # flat output length per block (row stride = Wp, cropped later)

    def kernel(x_ref, w_ref, bias_ref, o_ref, rhs_ref):
        # x_ref:    (1, Cin_p, L)        flat padded NCHW input, bf16
        # w_ref:    (TCout, k*k*Cin_p)   BN-scale-folded weights, bf16 (K tap-major)
        # bias_ref: (TCout, 1)           folded BN bias, f32
        # o_ref:    (1, TCout, OW)       channel-major flat output, bf16
        # rhs_ref:  (k*k*Cin_p, OW)      im2col staging buffer (VMEM scratch)

        # Build the im2col RHS once per block.  Each conv tap (kh, kw) is just
        # a lane-offset (and lane-strided, for stride > 1) slice of the flat
        # padded image -- no reshapes, no transposes, HW stays lane-dense.
        for kh in range(k):
            for kw in range(k):
                t = kh * k + kw
                base = kh * Wp + kw
                if stride == 1:
                    tap = x_ref[0, :, pl.ds(base, OW)]
                else:
                    tap = x_ref[0, :, pl.ds(base, OW, stride=stride)]
                # Sublane-tile-aligned store (Cin_p is a multiple of 8).
                rhs_ref[pl.ds(t * Cin_p, Cin_p), :] = tap

        # Single merged MXU contraction: (TCout, K) @ (K, OW), K = k*k*Cin_p,
        # f32 accumulation inside the MXU.
        acc = jnp.dot(w_ref[...], rhs_ref[...],
                      preferred_element_type=jnp.float32)      # (TCout, OW) f32

        # Fused BatchNorm bias + SiLU; exp and reciprocal land on the EUP slot.
        y = acc + bias_ref[...]
        y = y * pl.reciprocal(1.0 + jnp.exp(-y), approx=True)
        o_ref[0] = y.astype(o_ref.dtype)                       # bf16 store

    return kernel


def conv_bn_act(x_nchw, weight_oihw, gamma, beta, running_mean, running_var,
                *, stride=1, eps=1e-5):
    """Conv2d(bias=False, padding=(k-1)//2, groups=1) + BatchNorm2d(eval) + SiLU."""
    N, Cin, H, W = x_nchw.shape
    Cout, Cin_w, k, k2 = weight_oihw.shape
    assert k == k2 and Cin_w == Cin, "only groups=1 supported"

    pad = (k - 1) // 2
    Hp, Wp = H + 2 * pad, W + 2 * pad
    H_out = (Hp - k) // stride + 1
    W_out = (Wp - k) // stride + 1
    OW = H_out * Wp                      # per-image flat output length (Wp-strided rows)

    # Pad Cin so every im2col staging store is a full sublane tile.
    Cin_p = _round_up(Cin, 8)
    K = k * k * Cin_p

    # Halo-free second parallel grid axis over output channels.
    TCout = _pick_cout_tile(Cout)
    n_ct = Cout // TCout

    # ---- boundary glue (one fused XLA pass): pad NCHW spatially + over Cin,
    #      flatten spatial, tail-pad so every tap slice stays in-bounds, bf16.
    x_pad = jnp.pad(x_nchw, ((0, 0), (0, Cin_p - Cin), (pad, pad), (pad, pad)))
    L_need = (k - 1) * Wp + (k - 1) + stride * (OW - 1) + 1
    L = _round_up(max(Hp * Wp, L_need), 128)
    x_flat = jnp.pad(x_pad.reshape(N, Cin_p, Hp * Wp),
                     ((0, 0), (0, 0), (0, L - Hp * Wp))).astype(jnp.bfloat16)

    # ---- fold eval-mode BN scale into the weights; keep a per-channel bias.
    scale = gamma / jnp.sqrt(running_var + eps)                       # (Cout,)
    bias = (beta - running_mean * scale).reshape(Cout, 1).astype(jnp.float32)
    w_t = jnp.transpose(weight_oihw, (0, 2, 3, 1)) * scale[:, None, None, None]
    w_t = jnp.pad(w_t, ((0, 0), (0, 0), (0, 0), (0, Cin_p - Cin)))    # zero pad channels
    w2 = w_t.reshape(Cout, K).astype(jnp.bfloat16)                    # (Cout, k*k*Cin_p)

    kernel = _make_conv_bn_act_kernel(k, stride, Wp, H_out, Cin_p)

    # ---- VMEM accounting -> generation-aware limit.
    bytes_x = Cin_p * L * 2
    bytes_w = TCout * K * 2
    bytes_b = TCout * 128 * 4
    bytes_o = TCout * OW * 2
    bytes_rhs = K * OW * 2
    bytes_tmp = TCout * OW * 4 * 3        # f32 acc + epilogue temporaries
    needed = 2 * (bytes_x + bytes_w + bytes_b + bytes_o) + bytes_rhs + bytes_tmp
    vmem_limit = _vmem_limit_bytes(needed)

    # ---- grid-axis order: keep the larger re-fetched operand resident along
    #      the inner axis (weights vs. activations).
    weight_bytes = Cout * K * 2
    input_bytes = N * Cin_p * L * 2
    if (N - 1) * weight_bytes <= (n_ct - 1) * input_bytes:
        grid = (N, n_ct)                  # batch outer: input resident across Cout tiles
        im = lambda n, j: (n, 0, 0)
        wm = lambda n, j: (j, 0)
        bm = lambda n, j: (j, 0)
        om = lambda n, j: (n, j, 0)
    else:
        grid = (n_ct, N)                  # cout outer: weight tile resident across batch
        im = lambda j, n: (n, 0, 0)
        wm = lambda j, n: (j, 0)
        bm = lambda j, n: (j, 0)
        om = lambda j, n: (n, j, 0)

    out_flat = pl.pallas_call(
        kernel,
        out_shape=jax.ShapeDtypeStruct((N, Cout, OW), jnp.bfloat16),
        grid_spec=pltpu.PrefetchScalarGridSpec(
            num_scalar_prefetch=0,
            grid=grid,
            in_specs=[
                pl.BlockSpec((1, Cin_p, L), im),
                pl.BlockSpec((TCout, K), wm),
                pl.BlockSpec((TCout, 1), bm),
            ],
            out_specs=pl.BlockSpec((1, TCout, OW), om),
            scratch_shapes=[pltpu.VMEM((K, OW), jnp.bfloat16)],
        ),
        compiler_params=pltpu.CompilerParams(
            dimension_semantics=("parallel", "parallel"),
            vmem_limit_bytes=vmem_limit),
    )(x_flat, w2, bias)

    # Rows were produced with stride Wp; drop the (k-1) garbage columns per row.
    out = out_flat.reshape(N, Cout, H_out, Wp)[:, :, :, :W_out]
    return out                            # bf16, NCHW


def _reference(x_nchw, weight_oihw, gamma, beta, running_mean, running_var,
               *, stride=1, eps=1e-5):
    pad = (weight_oihw.shape[-1] - 1) // 2
    y = lax.conv_general_dilated(
        x_nchw.astype(jnp.float32), weight_oihw.astype(jnp.float32),
        window_strides=(stride, stride),
        padding=((pad, pad), (pad, pad)),
        dimension_numbers=("NCHW", "OIHW", "NCHW"))
    sc = (gamma / jnp.sqrt(running_var + eps)).reshape(1, -1, 1, 1)
    bs = (beta - running_mean * gamma / jnp.sqrt(running_var + eps)).reshape(1, -1, 1, 1)
    y = y * sc + bs
    return y * jax.nn.sigmoid(y)


if __name__ == "__main__":
    # Module config: ConvBNAct(in_planes=4, out_planes=8, kernel_size=3,
    #                          stride=1, groups=1)
    N, Cin, H, W = 2, 4, 16, 16
    Cout, k, stride = 8, 3, 1

    key = jax.random.PRNGKey(0)
    kx, kw_, kg, kb = jax.random.split(key, 4)

    x = jax.random.normal(kx, (N, Cin, H, W), dtype=jnp.float32)
    # Conv2d weight (OIHW), bias=False.
    weight = jax.random.normal(kw_, (Cout, Cin, k, k), dtype=jnp.float32) * 0.1
    # BatchNorm2d parameters / running stats (eval mode).
    gamma = 1.0 + 0.1 * jax.random.normal(kg, (Cout,), dtype=jnp.float32)
    beta = 0.1 * jax.random.normal(kb, (Cout,), dtype=jnp.float32)
    running_mean = jnp.zeros((Cout,), dtype=jnp.float32)
    running_var = jnp.ones((Cout,), dtype=jnp.float32)

    out = conv_bn_act(x, weight, gamma, beta, running_mean, running_var,
                      stride=stride)
    out = jax.block_until_ready(out)

    ref = _reference(x, weight, gamma, beta, running_mean, running_var,
                     stride=stride)
    ref = jax.block_until_ready(ref)

    assert out.shape == (N, Cout, H, W), out.shape
    # Tolerance covers bf16 MXU operands + bf16 output store (f32 accumulation).
    np.testing.assert_allclose(np.asarray(out.astype(jnp.float32)),
                               np.asarray(ref), rtol=3e-2, atol=3e-2)
    print("KERNEL_OK")
</pallas_src>

<mosaic_0001>
module attributes {stable_mosaic.version = 11 : i64} {
  func.func @kernel(%arg0: i32, %arg1: i32, %arg2: memref<1x8x384xbf16, #tpu.memory_space<vmem>>, %arg3: memref<8x72xbf16, #tpu.memory_space<vmem>>, %arg4: memref<8x1xf32, #tpu.memory_space<vmem>>, %arg5: memref<1x8x288xbf16, #tpu.memory_space<vmem>>, %arg6: memref<72x288xbf16, #tpu.memory_space<vmem>>) attributes {dimension_semantics = [#tpu.dimension_semantics<parallel>, #tpu.dimension_semantics<parallel>], iteration_bounds = array<i64: 1, 2>, scalar_prefetch = 0 : i64, scratch_operands = 1 : i64, tpu.core_type = #tpu.core_type<tc>, window_params = [{transform_indices = @transform_0, window_bounds = array<i64: 1, 8, 384>}, {transform_indices = @transform_1, window_bounds = array<i64: 8, 72>}, {transform_indices = @transform_2, window_bounds = array<i64: 8, 1>}, {transform_indices = @transform_3, window_bounds = array<i64: 1, 8, 288>}]} {
    %c0 = arith.constant 0 : index
    %c0_0 = arith.constant 0 : index
    %c0_1 = arith.constant 0 : index
    %0 = vector.load %arg2[%c0, %c0_0, %c0_1] : memref<1x8x384xbf16, #tpu.memory_space<vmem>>, vector<1x8x288xbf16>
    %1 = vector.shape_cast %0 : vector<1x8x288xbf16> to vector<8x288xbf16>
    %c0_2 = arith.constant 0 : index
    %c0_3 = arith.constant 0 : index
    %2 = vector.load %arg6[%c0_2, %c0_3] : memref<72x288xbf16, #tpu.memory_space<vmem>>, vector<8x288xbf16>
    tpu.vector_store %arg6[%c0_2, %c0_3], %1 {strides = array<i32>} : memref<72x288xbf16, #tpu.memory_space<vmem>>, vector<8x288xbf16>,
    %c0_4 = arith.constant 0 : index
    %c0_5 = arith.constant 0 : index
    %c1 = arith.constant 1 : index
    %3 = vector.load %arg2[%c0_4, %c0_5, %c1] : memref<1x8x384xbf16, #tpu.memory_space<vmem>>, vector<1x8x288xbf16>
    %4 = vector.shape_cast %3 : vector<1x8x288xbf16> to vector<8x288xbf16>
    %c8 = arith.constant 8 : index
    %c0_6 = arith.constant 0 : index
    %5 = vector.load %arg6[%c8, %c0_6] : memref<72x288xbf16, #tpu.memory_space<vmem>>, vector<8x288xbf16>
    tpu.vector_store %arg6[%c8, %c0_6], %4 {strides = array<i32>} : memref<72x288xbf16, #tpu.memory_space<vmem>>, vector<8x288xbf16>,
    %c0_7 = arith.constant 0 : index
    %c0_8 = arith.constant 0 : index
    %c2 = arith.constant 2 : index
    %6 = vector.load %arg2[%c0_7, %c0_8, %c2] : memref<1x8x384xbf16, #tpu.memory_space<vmem>>, vector<1x8x288xbf16>
    %7 = vector.shape_cast %6 : vector<1x8x288xbf16> to vector<8x288xbf16>
    %c16 = arith.constant 16 : index
    %c0_9 = arith.constant 0 : index
    %8 = vector.load %arg6[%c16, %c0_9] : memref<72x288xbf16, #tpu.memory_space<vmem>>, vector<8x288xbf16>
    tpu.vector_store %arg6[%c16, %c0_9], %7 {strides = array<i32>} : memref<72x288xbf16, #tpu.memory_space<vmem>>, vector<8x288xbf16>,
    %c0_10 = arith.constant 0 : index
    %c0_11 = arith.constant 0 : index
    %c18 = arith.constant 18 : index
    %9 = vector.load %arg2[%c0_10, %c0_11, %c18] : memref<1x8x384xbf16, #tpu.memory_space<vmem>>, vector<1x8x288xbf16>
    %10 = vector.shape_cast %9 : vector<1x8x288xbf16> to vector<8x288xbf16>
    %c24 = arith.constant 24 : index
    %c0_12 = arith.constant 0 : index
    %11 = vector.load %arg6[%c24, %c0_12] : memref<72x288xbf16, #tpu.memory_space<vmem>>, vector<8x288xbf16>
    tpu.vector_store %arg6[%c24, %c0_12], %10 {strides = array<i32>} : memref<72x288xbf16, #tpu.memory_space<vmem>>, vector<8x288xbf16>,
    %c0_13 = arith.constant 0 : index
    %c0_14 = arith.constant 0 : index
    %c19 = arith.constant 19 : index
    %12 = vector.load %arg2[%c0_13, %c0_14, %c19] : memref<1x8x384xbf16, #tpu.memory_space<vmem>>, vector<1x8x288xbf16>
    %13 = vector.shape_cast %12 : vector<1x8x288xbf16> to vector<8x288xbf16>
    %c32 = arith.constant 32 : index
    %c0_15 = arith.constant 0 : index
    %14 = vector.load %arg6[%c32, %c0_15] : memref<72x288xbf16, #tpu.memory_space<vmem>>, vector<8x288xbf16>
    tpu.vector_store %arg6[%c32, %c0_15], %13 {strides = array<i32>} : memref<72x288xbf16, #tpu.memory_space<vmem>>, vector<8x288xbf16>,
    %c0_16 = arith.constant 0 : index
    %c0_17 = arith.constant 0 : index
    %c20 = arith.constant 20 : index
    %15 = vector.load %arg2[%c0_16, %c0_17, %c20] : memref<1x8x384xbf16, #tpu.memory_space<vmem>>, vector<1x8x288xbf16>
    %16 = vector.shape_cast %15 : vector<1x8x288xbf16> to vector<8x288xbf16>
    %c40 = arith.constant 40 : index
    %c0_18 = arith.constant 0 : index
    %17 = vector.load %arg6[%c40, %c0_18] : memref<72x288xbf16, #tpu.memory_space<vmem>>, vector<8x288xbf16>
    tpu.vector_store %arg6[%c40, %c0_18], %16 {strides = array<i32>} : memref<72x288xbf16, #tpu.memory_space<vmem>>, vector<8x288xbf16>,
    %c0_19 = arith.constant 0 : index
    %c0_20 = arith.constant 0 : index
    %c36 = arith.constant 36 : index
    %18 = vector.load %arg2[%c0_19, %c0_20, %c36] : memref<1x8x384xbf16, #tpu.memory_space<vmem>>, vector<1x8x288xbf16>
    %19 = vector.shape_cast %18 : vector<1x8x288xbf16> to vector<8x288xbf16>
    %c48 = arith.constant 48 : index
    %c0_21 = arith.constant 0 : index
    %20 = vector.load %arg6[%c48, %c0_21] : memref<72x288xbf16, #tpu.memory_space<vmem>>, vector<8x288xbf16>
    tpu.vector_store %arg6[%c48, %c0_21], %19 {strides = array<i32>} : memref<72x288xbf16, #tpu.memory_space<vmem>>, vector<8x288xbf16>,
    %c0_22 = arith.constant 0 : index
    %c0_23 = arith.constant 0 : index
    %c37 = arith.constant 37 : index
    %21 = vector.load %arg2[%c0_22, %c0_23, %c37] : memref<1x8x384xbf16, #tpu.memory_space<vmem>>, vector<1x8x288xbf16>
    %22 = vector.shape_cast %21 : vector<1x8x288xbf16> to vector<8x288xbf16>
    %c56 = arith.constant 56 : index
    %c0_24 = arith.constant 0 : index
    %23 = vector.load %arg6[%c56, %c0_24] : memref<72x288xbf16, #tpu.memory_space<vmem>>, vector<8x288xbf16>
    tpu.vector_store %arg6[%c56, %c0_24], %22 {strides = array<i32>} : memref<72x288xbf16, #tpu.memory_space<vmem>>, vector<8x288xbf16>,
    %c0_25 = arith.constant 0 : index
    %c0_26 = arith.constant 0 : index
    %c38 = arith.constant 38 : index
    %24 = vector.load %arg2[%c0_25, %c0_26, %c38] : memref<1x8x384xbf16, #tpu.memory_space<vmem>>, vector<1x8x288xbf16>
    %25 = vector.shape_cast %24 : vector<1x8x288xbf16> to vector<8x288xbf16>
    %c64 = arith.constant 64 : index
    %c0_27 = arith.constant 0 : index
    %26 = vector.load %arg6[%c64, %c0_27] : memref<72x288xbf16, #tpu.memory_space<vmem>>, vector<8x288xbf16>
    tpu.vector_store %arg6[%c64, %c0_27], %25 {strides = array<i32>} : memref<72x288xbf16, #tpu.memory_space<vmem>>, vector<8x288xbf16>,
    %c0_28 = arith.constant 0 : index
    %c0_29 = arith.constant 0 : index
    %27 = vector.load %arg3[%c0_28, %c0_29] : memref<8x72xbf16, #tpu.memory_space<vmem>>, vector<8x72xbf16>
    %c0_30 = arith.constant 0 : index
    %c0_31 = arith.constant 0 : index
    %28 = vector.load %arg6[%c0_30, %c0_31] : memref<72x288xbf16, #tpu.memory_space<vmem>>, vector<72x288xbf16>
    %cst = arith.constant dense<0.000000e+00> : vector<8x288xf32>
    %29 = tpu.matmul %27, %28, %cst {dimension_numbers = #tpu.dot_dimension_numbers<[1], [0], [0], [1], [0, 0, 1, 1], [], []>} : vector<8x72xbf16>, vector<72x288xbf16>, vector<8x288xf32> -> vector<8x288xf32>
    %c0_32 = arith.constant 0 : index
    %c0_33 = arith.constant 0 : index
    %30 = vector.load %arg4[%c0_32, %c0_33] : memref<8x1xf32, #tpu.memory_space<vmem>>, vector<8x1xf32>
    %31 = vector.broadcast %30 : vector<8x1xf32> to vector<8x288xf32>
    %32 = arith.addf %29, %31 : vector<8x288xf32>
    %cst_34 = arith.constant 0.000000e+00 : f32
    %33 = vector.broadcast %cst_34 : f32 to vector<8x288xf32>
    %34 = arith.subf %33, %32 : vector<8x288xf32>
    %35 = math.exp %34 : vector<8x288xf32>
    %cst_35 = arith.constant 1.000000e+00 : f32
    %36 = vector.broadcast %cst_35 : f32 to vector<8x288xf32>
    %37 = arith.addf %36, %35 : vector<8x288xf32>
    %38 = tpu.reciprocal %37 {approx = true} : vector<8x288xf32> -> vector<8x288xf32>
    %39 = arith.mulf %32, %38 : vector<8x288xf32>
    %40 = arith.truncf %39 : vector<8x288xf32> to vector<8x288xbf16>
    %c0_36 = arith.constant 0 : index
    %c0_37 = arith.constant 0 : index
    %c0_38 = arith.constant 0 : index
    %41 = vector.load %arg5[%c0_36, %c0_37, %c0_38] : memref<1x8x288xbf16, #tpu.memory_space<vmem>>, vector<1x8x288xbf16>
    %42 = vector.shape_cast %41 : vector<1x8x288xbf16> to vector<8x288xbf16>
    %43 = vector.shape_cast %40 : vector<8x288xbf16> to vector<1x8x288xbf16>
    tpu.vector_store %arg5[%c0_36, %c0_37, %c0_38], %43 {strides = array<i32>} : memref<1x8x288xbf16, #tpu.memory_space<vmem>>, vector<1x8x288xbf16>,
    return
  }
  func.func @transform_0(%arg0: i32, %arg1: i32) -> (i32, i32, i32) {
    %c0_i32 = arith.constant 0 : i32
    %c0_i32_0 = arith.constant 0 : i32
    %c0_i32_1 = arith.constant 0 : i32
    return %arg1, %c0_i32, %c0_i32_0 : i32, i32, i32
  }
  func.func @transform_1(%arg0: i32, %arg1: i32) -> (i32, i32) {
    %c0_i32 = arith.constant 0 : i32
    %c0_i32_0 = arith.constant 0 : i32
    return %arg0, %c0_i32 : i32, i32
  }
  func.func @transform_2(%arg0: i32, %arg1: i32) -> (i32, i32) {
    %c0_i32 = arith.constant 0 : i32
    %c0_i32_0 = arith.constant 0 : i32
    return %arg0, %c0_i32 : i32, i32
  }
  func.func @transform_3(%arg0: i32, %arg1: i32) -> (i32, i32, i32) {
    %c0_i32 = arith.constant 0 : i32
    %c0_i32_0 = arith.constant 0 : i32
    return %arg1, %arg0, %c0_i32 : i32, i32, i32
  }
}

</mosaic_0001>

<llo_original>
// kernel: tpu_custom_call.1
$region0: #{tpu_custom_call.1}
  #allocation0 [shape = 'u32[]', space=smem, size = 0x4, offset = 0x4, fixed_abs, tag = 'smem constant byte address 0x4 - core index']
  #allocation1 [shape = 'u32[144,128]{1,0:T(1,128)}', space=vmem, size = 0x12000, scoped, tag = 'internal scratch']
  #allocation2 [shape = 'bf16[72,288]{1,0:T(8,128)(2,1)}', space=vmem, size = 0xd800, scoped, tag = 'scratch operand']
  %s0 = inlined_call_operand.hbm [shape: bf16[2,8,384], index: 0, kind: input, shape index: {}]
  %s1 = inlined_call_operand.vmem [shape: bf16[8,72], index: 1, kind: input, shape index: {}]
  %s2 = inlined_call_operand.vmem [shape: f32[8,1], index: 2, kind: input, shape index: {}]
  %s3 = inlined_call_operand.hbm [shape: bf16[2,8,288], index: 3, kind: output, shape index: {}]
  %s4 = sld [smem:[#allocation0]]
  $region49: #{tpu_custom_call.1} parent=0
    _
  %s6 = ssub.s32 1, %s4
  %s7 = scalar_select 0, %s6, %s4
  $region1: #{tpu_custom_call.1} parent=0
    #allocation3 [shape = 'u8[12288]{0}', space=vmem, size = 0x3000, scoped, tag = 'input window, operand 0']
    #allocation4 [shape = 's32[2]{0}', space=sflag, size = 0x8, scoped, tag = 'scoped memory for tpu_custom_call.1']
    #allocation5 [shape = 's32[2]{0}', space=sflag, size = 0x8, scoped, tag = 'scoped memory for tpu_custom_call.1']
    #allocation6 [shape = 'u8[12288]{0}', space=vmem, size = 0x3000, scoped, tag = 'output window, operand 0']
    %8 = vsyncpa [#allocation4], 0
    %s9 = scalar_lea.sflag [#allocation4], 1
    %10 = vsyncpa %s9, 0
    %11 = vsyncpa [#allocation5], 0
    %s12 = scalar_lea.sflag [#allocation5], 1
    %13 = vsyncpa %s12, 0
    loop: start=0, step=1, limit=4
    $region2: #{tpu_custom_call.1} parent=1 // loop_pre_header
      _
    $region3: #{tpu_custom_call.1} parent=1 // loop_header
      %s15 = sphi 0, %s19
      %p16 = scmp.ge.s32.totalorder %s15, 4
      %s22 = sphi 0, %s34
      %s23 = sphi 0, %s30
      %s24 = sphi 0, %s22
      %s25 = sphi 0, %s23
      %s26 = sphi 0, %s24
      %s27 = sphi 0, %s25
      %s37 = sphi 0, %s39
      %s40 = sphi 0, %s37
      %s41 = sphi 0, %s40
      %s57 = sphi 0, %s41
      %s63 = sphi 0, %s65
      %s66 = sphi 0, %s63
      %s67 = sphi 0, %s66
      %s83 = sphi 0, %s67
      %s89 = sphi 0, %s91
      %s92 = sphi 0, %s89
      %s93 = sphi 0, %s92
      %s109 = sphi 0, %s93
      %s117 = sphi 0, %s119
      %s120 = sphi 0, %s117
      %s121 = sphi 0, %s120
      %s137 = sphi 0, %s121
    $region4: #{tpu_custom_call.1} parent=1 // loop_header_branch
      %18 = sbr.rel (%p16) target = $region8
    $region5: #{tpu_custom_call.1} parent=1 // loop_body
      %s20 = ssub.s32 %s15, 1
      %s21 = ssub.s32 %s15, 2
      %s28 = sadd.s32 1, %s23
      %p29 = scmp.ge.s32.totalorder %s28, 2
      %s30 = scalar_select %p29, 0, %s28
      %s31 = sadd.s32 1, %s22
      %s32 = scalar_select %p29, %s31, %s22
      %p33 = scmp.ge.s32.totalorder %s32, 1
      %s34 = scalar_select %p33, 0, %s32
      %s35 = ssub.s32 %s23, %s30
      %p36 = scmp.eq.s32.totalorder %s35, 0
      %s38 = sadd.s32 %s37, 1
      %s39 = scalar_select %p36, %s37, %s38
      %p42 = pneg %p36
      %p43 = scmp.eq.s32.totalorder %s15, 1
      %p44 = por %p42, %p43
      %p45 = scmp.ne.s32.totalorder %s37, %s40
      %p46 = scmp.eq.s32.totalorder %s15, 0
      %p47 = por %p45, %p46
      %p48 = scmp.ne.s32.totalorder %s37, %s40
      %p49 = scmp.eq.s32.totalorder %s20, 1
      %p50 = por %p48, %p49
      %p51 = scmp.ne.s32.totalorder %s40, %s41
      %p52 = scmp.eq.s32.totalorder %s20, 0
      %p53 = por %p51, %p52
      %p54 = scmp.ne.s32.totalorder %s40, %s41
      %p55 = scmp.eq.s32.totalorder %s21, 1
      %p56 = por %p54, %p55
      %p58 = scmp.ne.s32.totalorder %s41, %s57
      %p59 = scmp.eq.s32.totalorder %s21, 0
      %p60 = por %p58, %p59
      %s61 = ssub.s32 %s22, %s34
      %p62 = scmp.eq.s32.totalorder %s61, 0
      %s64 = sadd.s32 %s63, 1
      %s65 = scalar_select %p62, %s63, %s64
      %p68 = pneg %p62
      %p69 = scmp.eq.s32.totalorder %s15, 1
      %p70 = por %p68, %p69
      %p71 = scmp.ne.s32.totalorder %s63, %s66
      %p72 = scmp.eq.s32.totalorder %s15, 0
      %p73 = por %p71, %p72
      %p74 = scmp.ne.s32.totalorder %s63, %s66
      %p75 = scmp.eq.s32.totalorder %s20, 1
      %p76 = por %p74, %p75
      %p77 = scmp.ne.s32.totalorder %s66, %s67
      %p78 = scmp.eq.s32.totalorder %s20, 0
      %p79 = por %p77, %p78
      %p80 = scmp.ne.s32.totalorder %s66, %s67
      %p81 = scmp.eq.s32.totalorder %s21, 1
      %p82 = por %p80, %p81
      %p84 = scmp.ne.s32.totalorder %s67, %s83
      %p85 = scmp.eq.s32.totalorder %s21, 0
      %p86 = por %p84, %p85
      %s87 = ssub.s32 %s22, %s34
      %p88 = scmp.eq.s32.totalorder %s87, 0
      %s90 = sadd.s32 %s89, 1
      %s91 = scalar_select %p88, %s89, %s90
      %p94 = pneg %p88
      %p95 = scmp.eq.s32.totalorder %s15, 1
      %p96 = por %p94, %p95
      %p97 = scmp.ne.s32.totalorder %s89, %s92
      %p98 = scmp.eq.s32.totalorder %s15, 0
      %p99 = por %p97, %p98
      %p100 = scmp.ne.s32.totalorder %s89, %s92
      %p101 = scmp.eq.s32.totalorder %s20, 1
      %p102 = por %p100, %p101
      %p103 = scmp.ne.s32.totalorder %s92, %s93
      %p104 = scmp.eq.s32.totalorder %s20, 0
      %p105 = por %p103, %p104
      %p106 = scmp.ne.s32.totalorder %s92, %s93
      %p107 = scmp.eq.s32.totalorder %s21, 1
      %p108 = por %p106, %p107
      %p110 = scmp.ne.s32.totalorder %s93, %s109
      %p111 = scmp.eq.s32.totalorder %s21, 0
      %p112 = por %p110, %p111
      %s113 = ssub.s32 %s23, %s30
      %s114 = ssub.s32 %s22, %s34
      %s115 = sor.u32 %s113, %s114
      %p116 = scmp.eq.s32.totalorder %s115, 0
      %s118 = sadd.s32 %s117, 1
      %s119 = scalar_select %p116, %s117, %s118
      %p122 = pneg %p116
      %p123 = scmp.eq.s32.totalorder %s15, 1
      %p124 = por %p122, %p123
      %p125 = scmp.ne.s32.totalorder %s117, %s120
      %p126 = scmp.eq.s32.totalorder %s15, 0
      %p127 = por %p125, %p126
      %p128 = scmp.ne.s32.totalorder %s117, %s120
      %p129 = scmp.eq.s32.totalorder %s20, 1
      %p130 = por %p128, %p129
      %p131 = scmp.ne.s32.totalorder %s120, %s121
      %p132 = scmp.eq.s32.totalorder %s20, 0
      %p133 = por %p131, %p132
      %p134 = scmp.ne.s32.totalorder %s120, %s121
      %p135 = scmp.eq.s32.totalorder %s21, 1
      %p136 = por %p134, %p135
      %p138 = scmp.ne.s32.totalorder %s121, %s137
      %p139 = scmp.eq.s32.totalorder %s21, 0
      %p140 = por %p138, %p139
      %p141 = scmp.le.s32.totalorder 1, %s15
      %p142 = scmp.lt.s32.totalorder %s15, 3
      %p143 = pnand %p141, %p142
      %p144 = pneg %p143
      // Predicated region
      $region9: #{tpu_custom_call.1} parent=5 // pred_check
        _
      $region10: #{tpu_custom_call.1} parent=5 // pred_check_branch
        %146 = sbr.rel (%p143) target = $region12
      $region11: #{tpu_custom_call.1} parent=5 // pred_region
        %s147 = ssub.s32 %s15, 1
        // Predicated region
        $region13: #{tpu_custom_call.1} parent=11 // pred_check
          %p148 = pneg %p79
        $region14: #{tpu_custom_call.1} parent=11 // pred_check_branch
          %150 = sbr.rel (%p148) target = $region16
        $region15: #{tpu_custom_call.1} parent=11 // pred_region
          %p151 = scmp.lt.s32.totalorder %s24, 0
          %s152 = scalar_select %p151, %s24, 0
          %s153 = smul.addr %s152, 4
          %s154 = scalar_lea.vmem %s1, %s153
        $region16: #{tpu_custom_call.1} parent=11 // pred_fallthru
          _
        // Predicated region
        $region17: #{tpu_custom_call.1} parent=11 // pred_check
          %p155 = pneg %p105
        $region18: #{tpu_custom_call.1} parent=11 // pred_check_branch
          %157 = sbr.rel (%p155) target = $region20
        $region19: #{tpu_custom_call.1} parent=11 // pred_region
          %p158 = scmp.lt.s32.totalorder %s24, 0
          %s159 = scalar_select %p158, %s24, 0
          %s160 = smul.addr %s159, 8
          %s161 = scalar_lea.vmem %s2, %s160
        $region20: #{tpu_custom_call.1} parent=11 // pred_fallthru
          _
      $region12: #{tpu_custom_call.1} parent=5 // pred_fallthru
        _
      %p162 = scmp.lt.s32.totalorder %s15, 2
      // Predicated region
      $region21: #{tpu_custom_call.1} parent=5 // pred_check
        %p163 = pneg %p162
      $region22: #{tpu_custom_call.1} parent=5 // pred_check_branch
        %165 = sbr.rel (%p163) target = $region24
      $region23: #{tpu_custom_call.1} parent=5 // pred_region
        // Predicated region
        $region25: #{tpu_custom_call.1} parent=23 // pred_check
          %p166 = pneg %p47
        $region26: #{tpu_custom_call.1} parent=23 // pred_check_branch
          %168 = sbr.rel (%p166) target = $region28
        $region27: #{tpu_custom_call.1} parent=23 // pred_region
          %s169 = sand.u32 %s37, 1
          %s170 = scalar_lea.sflag [#allocation4], %s169
          %s171 = sand.u32 %s37, 1
          %s172 = smul.addr %s171, 12
          %s173 = scalar_lea.vmem [#allocation3], %s172
          %s175 = ssub.s32 192, 192
          %176 = vsyncadd %s170, %s175
          %s177 = smul.addr %s23, 3
          %s178 = smul.addr %s177, 64
          %s179 = scalar_lea.hbm %s0, %s178
          %s181 = sshll.u32 %s173, 4
          %s182 = int_to_ptr.vmem [resolvable:$true] %s181
          %184 = dma.hbm_to_vmem [thread:$0]  %s179, 192, %s182, %s170
        $region28: #{tpu_custom_call.1} parent=23 // pred_fallthru
          _
      $region24: #{tpu_custom_call.1} parent=5 // pred_fallthru
        _
      %p185 = scmp.le.s32.totalorder 1, %s15
      %p186 = scmp.lt.s32.totalorder %s15, 3
      %p187 = pnand %p185, %p186
      %p188 = pneg %p187
      // Predicated region
      $region29: #{tpu_custom_call.1} parent=5 // pred_check
        _
      $region30: #{tpu_custom_call.1} parent=5 // pred_check_branch
        %190 = sbr.rel (%p187) target = $region32
      $region31: #{tpu_custom_call.1} parent=5 // pred_region
        %s191 = ssub.s32 %s15, 1
        %s192 = sand.u32 %s40, 1
        %s193 = scalar_lea.sflag [#allocation4], %s192
        %s194 = sand.u32 %s40, 1
        %s195 = smul.addr %s194, 12
        %s196 = scalar_lea.vmem [#allocation3], %s195
        // Predicated region
        $region33: #{tpu_custom_call.1} parent=31 // pred_check
          %p197 = pneg %p53
        $region34: #{tpu_custom_call.1} parent=31 // pred_check_branch
          %199 = sbr.rel (%p197) target = $region36
        $region35: #{tpu_custom_call.1} parent=31 // pred_region
          %200 = dma.done %s193, 192
        $region36: #{tpu_custom_call.1} parent=31 // pred_fallthru
          _
        %s201 = sand.u32 %s40, 1
        %s202 = scalar_lea.sflag [#allocation4], %s201
        %s203 = sand.u32 %s40, 1
        %s204 = smul.addr %s203, 12
        %s205 = scalar_lea.vmem [#allocation3], %s204
        %p206 = pneg %p53
        %p207 = pneg %p50
        %p208 = scmp.lt.s32.totalorder %s24, 0
        %s209 = scalar_select %p208, %s24, 0
        %s210 = smul.addr %s209, 4
        %s211 = scalar_lea.vmem %s1, %s210
        %p212 = pneg %p79
        %p213 = pneg %p76
        %p214 = scmp.lt.s32.totalorder %s24, 0
        %s215 = scalar_select %p214, %s24, 0
        %s216 = smul.addr %s215, 8
        %s217 = scalar_lea.vmem %s2, %s216
        %p218 = pneg %p105
        %p219 = pneg %p102
        %p220 = pneg %p133
        %p221 = pneg %p130
        %s222 = sand.u32 %s120, 1
        %s223 = scalar_lea.sflag [#allocation5], %s222
        %s224 = sand.u32 %s120, 1
        %s225 = smul.addr %s224, 12
        %s226 = scalar_lea.vmem [#allocation6], %s225
        %p227 = scmp.lt.s32.totalorder %s24, 0
        %s228 = scalar_select %p227, %s24, 0
        %s229 = smul.addr %s228, 4
        %s230 = scalar_lea.vmem %s1, %s229
        %p231 = scmp.lt.s32.totalorder %s24, 0
        %s232 = scalar_select %p231, %s24, 0
        %s233 = smul.addr %s232, 8
        %s234 = scalar_lea.vmem %s2, %s233
        %v236 = vld [vmem:[%s196] sm:$0xff]
        %v237 = vld [vmem:[%s196 + $0x8] sm:$0xf]
        %238 = vst [vmem:[#allocation2] sm:$0xff] %v236
        %vm239 = vcmask 257024
        %240 = vst.msk [vmem:[#allocation2 + $0x8] sm:$0xf] %vm239, %v237
        %v241 = vld [vmem:[%s196] sm:$0xff]
        %v242 = vld [vmem:[%s196 + $0x8] sm:$0xf]
        %245 = vrot.lane.b32.xlu0 %v241, 127
        %v246 = vpop.permute.xlu0 %245
        %247 = vrot.lane.b32.xlu0 %v242, 127
        %v248 = vpop.permute.xlu0 %247
        %v249 = vrot.slane %v246, 4
        %v250 = vrot.slane %v248, 4
        %vm251 = vcmask 1043456
        %v252 = vsel %vm251, %v249, %v250
        %vm253 = vcmask 1039360
        %v254 = vsel %vm253, %v246, %v252
        %257 = vst [vmem:[#allocation2 + $0xc] sm:$0xff] %v254
        %258 = vst.msk [vmem:[#allocation2 + $0x14] sm:$0xf] %vm239, %v248
        %v259 = vld [vmem:[%s196] sm:$0xff]
        %v260 = vld [vmem:[%s196 + $0x8] sm:$0xf]
        %263 = vrot.lane.b32.xlu0 %v259, 126
        %v264 = vpop.permute.xlu0 %263
        %265 = vrot.lane.b32.xlu0 %v260, 126
        %v266 = vpop.permute.xlu0 %265
        %v267 = vrot.slane %v264, 4
        %v268 = vrot.slane %v266, 4
        %v269 = vsel %vm251, %v267, %v268
        %vm270 = vcmask 1031168
        %v271 = vsel %vm270, %v264, %v269
        %274 = vst [vmem:[#allocation2 + $0x18] sm:$0xff] %v271
        %275 = vst.msk [vmem:[#allocation2 + $0x20] sm:$0xf] %vm239, %v266
        %v276 = vld [vmem:[%s196] sm:$0xff]
        %v277 = vld [vmem:[%s196 + $0x8] sm:$0xf]
        %280 = vrot.lane.b32.xlu0 %v276, 110
        %v281 = vpop.permute.xlu0 %280
        %282 = vrot.lane.b32.xlu0 %v277, 110
        %v283 = vpop.permute.xlu0 %282
        %v284 = vrot.slane %v281, 4
        %v285 = vrot.slane %v283, 4
        %v286 = vsel %vm251, %v284, %v285
        %vm287 = vcmask 900096
        %v288 = vsel %vm287, %v281, %v286
        %291 = vst [vmem:[#allocation2 + $0x24] sm:$0xff] %v288
        %292 = vst.msk [vmem:[#allocation2 + $0x2c] sm:$0xf] %vm239, %v283
        %v293 = vld [vmem:[%s196] sm:$0xff]
        %v294 = vld [vmem:[%s196 + $0x8] sm:$0xf]
        %297 = vrot.lane.b32.xlu0 %v293, 109
        %v298 = vpop.permute.xlu0 %297
        %299 = vrot.lane.b32.xlu0 %v294, 109
        %v300 = vpop.permute.xlu0 %299
        %v301 = vrot.slane %v298, 4
        %v302 = vrot.slane %v300, 4
        %v303 = vsel %vm251, %v301, %v302
        %vm304 = vcmask 891904
        %v305 = vsel %vm304, %v298, %v303
        %308 = vst [vmem:[#allocation2 + $0x30] sm:$0xff] %v305
        %309 = vst.msk [vmem:[#allocation2 + $0x38] sm:$0xf] %vm239, %v300
        %v310 = vld [vmem:[%s196] sm:$0xff]
        %v311 = vld [vmem:[%s196 + $0x8] sm:$0xf]
        %314 = vrot.lane.b32.xlu0 %v310, 108
        %v315 = vpop.permute.xlu0 %314
        %316 = vrot.lane.b32.xlu0 %v311, 108
        %v317 = vpop.permute.xlu0 %316
        %v318 = vrot.slane %v315, 4
        %v319 = vrot.slane %v317, 4
        %v320 = vsel %vm251, %v318, %v319
        %vm321 = vcmask 883712
        %v322 = vsel %vm321, %v315, %v320
        %325 = vst [vmem:[#allocation2 + $0x3c] sm:$0xff] %v322
        %326 = vst.msk [vmem:[#allocation2 + $0x44] sm:$0xf] %vm239, %v317
        %v327 = vld [vmem:[%s196] sm:$0xff]
        %v328 = vld [vmem:[%s196 + $0x8] sm:$0xf]
        %331 = vrot.lane.b32.xlu0 %v327, 92
        %v332 = vpop.permute.xlu0 %331
        %333 = vrot.lane.b32.xlu0 %v328, 92
        %v334 = vpop.permute.xlu0 %333
        %v335 = vrot.slane %v332, 4
        %v336 = vrot.slane %v334, 4
        %v337 = vsel %vm251, %v335, %v336
        %vm338 = vcmask 752640
        %v339 = vsel %vm338, %v332, %v337
        %342 = vst [vmem:[#allocation2 + $0x48] sm:$0xff] %v339
        %343 = vst.msk [vmem:[#allocation2 + $0x50] sm:$0xf] %vm239, %v334
        %v344 = vld [vmem:[%s196] sm:$0xff]
        %v345 = vld [vmem:[%s196 + $0x8] sm:$0xf]
        %348 = vrot.lane.b32.xlu0 %v344, 91
        %v349 = vpop.permute.xlu0 %348
        %350 = vrot.lane.b32.xlu0 %v345, 91
        %v351 = vpop.permute.xlu0 %350
        %v352 = vrot.slane %v349, 4
        %v353 = vrot.slane %v351, 4
        %v354 = vsel %vm251, %v352, %v353
        %vm355 = vcmask 744448
        %v356 = vsel %vm355, %v349, %v354
        %359 = vst [vmem:[#allocation2 + $0x54] sm:$0xff] %v356
        %360 = vst.msk [vmem:[#allocation2 + $0x5c] sm:$0xf] %vm239, %v351
        %v361 = vld [vmem:[%s196] sm:$0xff]
        %v362 = vld [vmem:[%s196 + $0x8] sm:$0xf]
        %365 = vrot.lane.b32.xlu0 %v361, 90
        %v366 = vpop.permute.xlu0 %365
        %367 = vrot.lane.b32.xlu0 %v362, 90
        %v368 = vpop.permute.xlu0 %367
        %v369 = vrot.slane %v366, 4
        %v370 = vrot.slane %v368, 4
        %v371 = vsel %vm251, %v369, %v370
        %vm372 = vcmask 736256
        %v373 = vsel %vm372, %v366, %v371
        %376 = vst [vmem:[#allocation2 + $0x60] sm:$0xff] %v373
        %377 = vst.msk [vmem:[#allocation2 + $0x68] sm:$0xf] %vm239, %v368
        %v378 = vld [vmem:[%s230] sm:$0xf]
        %v379 = vld [vmem:[#allocation2] sm:$0xff]
        %v380 = vld [vmem:[#allocation2 + $0x8] sm:$0xf]
        %v381 = vld [vmem:[#allocation2 + $0xc] sm:$0xff]
        %v382 = vld [vmem:[#allocation2 + $0x14] sm:$0xf]
        %v383 = vld [vmem:[#allocation2 + $0x18] sm:$0xff]
        %v384 = vld [vmem:[#allocation2 + $0x20] sm:$0xf]
        %v385 = vld [vmem:[#allocation2 + $0x24] sm:$0xff]
        %v386 = vld [vmem:[#allocation2 + $0x2c] sm:$0xf]
        %v387 = vld [vmem:[#allocation2 + $0x30] sm:$0xff]
        %v388 = vld [vmem:[#allocation2 + $0x38] sm:$0xf]
        %v389 = vld [vmem:[#allocation2 + $0x3c] sm:$0xff]
        %v390 = vld [vmem:[#allocation2 + $0x44] sm:$0xf]
        %v391 = vld [vmem:[#allocation2 + $0x48] sm:$0xff]
        %v392 = vld [vmem:[#allocation2 + $0x50] sm:$0xf]
        %v393 = vld [vmem:[#allocation2 + $0x54] sm:$0xff]
        %v394 = vld [vmem:[#allocation2 + $0x5c] sm:$0xf]
        %v395 = vld [vmem:[#allocation2 + $0x60] sm:$0xff]
        %v396 = vld [vmem:[#allocation2 + $0x68] sm:$0xf]
        %v397 = vld [vmem:[%s234] sm:$0xff]
        %399 = vset.pattern.permute.xlu0 0
        %400 = vperm.xlu0 %399, %v397
        %v401 = vpop.permute.xlu0 %400
        %v421 = vunpack.c.l.b16 %v379
        %v422 = vunpack.c.h.b16 %v379
        %v423 = vunpack.c.l.b16 %v380
        %v424 = vunpack.c.l.b16 %v381
        %v425 = vunpack.c.h.b16 %v381
        %v426 = vunpack.c.l.b16 %v382
        %v427 = vunpack.c.l.b16 %v383
        %v428 = vunpack.c.h.b16 %v383
        %v429 = vunpack.c.l.b16 %v384
        %v430 = vunpack.c.l.b16 %v385
        %v431 = vunpack.c.h.b16 %v385
        %v432 = vunpack.c.l.b16 %v386
        %v433 = vunpack.c.l.b16 %v387
        %v434 = vunpack.c.h.b16 %v387
        %v435 = vunpack.c.l.b16 %v388
        %v436 = vunpack.c.l.b16 %v389
        %v437 = vunpack.c.h.b16 %v389
        %v438 = vunpack.c.l.b16 %v390
        %v439 = vunpack.c.l.b16 %v391
        %v440 = vunpack.c.h.b16 %v391
        %v441 = vunpack.c.l.b16 %v392
        %v442 = vunpack.c.l.b16 %v393
        %v443 = vunpack.c.h.b16 %v393
        %v444 = vunpack.c.l.b16 %v394
        %v445 = vunpack.c.l.b16 %v395
        %v446 = vunpack.c.h.b16 %v395
        %v447 = vunpack.c.l.b16 %v396
        %v448 = vpack.c.b16 %v424, %v421
        %v449 = vpack.c.b16 %v425, %v422
        %v450 = vpack.c.b16 %v426, %v423
        %v451 = vpack.c.b16 %v430, %v427
        %v452 = vpack.c.b16 %v431, %v428
        %v453 = vpack.c.b16 %v432, %v429
        %v454 = vpack.c.b16 %v436, %v433
        %v455 = vpack.c.b16 %v437, %v434
        %v456 = vpack.c.b16 %v438, %v435
        %v457 = vpack.c.b16 %v442, %v439
        %v458 = vpack.c.b16 %v443, %v440
        %v459 = vpack.c.b16 %v444, %v441
        %v460 = vpack.c.b16 %v445, %v445
        %v461 = vpack.c.b16 %v446, %v446
        %v462 = vpack.c.b16 %v447, %v447
        %vm475 = vcmask 588800
        %v477 = vsel %vm475, %v378, 0
        %vm479 = vcmask 1043456
        %v481 = vsel %vm479, %v460, 0
        %v484 = vsel %vm479, %v461, 0
        %v487 = vsel %vm479, %v462, 0
        %489 = vmatprep.subr.bf16.mxu0 %v449
        %490 = vmatpush1.bf16.msra.mxu0 %v448
        %491 = vmatprep.subr.bf16.mxu0 %v452
        %492 = vmatpush1.bf16.msra.mxu0 %v451
        %493 = vmatprep.subr.bf16.mxu0 %v455
        %494 = vmatpush1.bf16.msra.mxu0 %v454
        %495 = vmatprep.subr.bf16.mxu0 %v458
        %496 = vmatpush1.bf16.msra.mxu0 %v457
        %497 = vmatprep.subr.bf16.mxu0 %v484
        %498 = vmatpush1.bf16.msra.mxu0 %v481
        %499 = vmatprep.subr.bf16.mxu0 0
        %500 = vmatpush1.bf16.msra.mxu0 0
        %501 = vmatprep.subr.bf16.mxu0 0
        %502 = vmatpush1.bf16.msra.mxu0 0
        %503 = vmatprep.subr.bf16.mxu0 0
        %504 = vmatpush1.bf16.msra.mxu0 0
        %505 = vmatprep.subr.bf16.mxu0 0
        %506 = vmatpush1.bf16.msra.mxu0 0
        %507 = vmatprep.subr.bf16.mxu0 0
        %508 = vmatpush1.bf16.msra.mxu0 0
        %509 = vmatprep.subr.bf16.mxu0 0
        %510 = vmatpush1.bf16.msra.mxu0 0
        %511 = vmatprep.subr.bf16.mxu0 0
        %512 = vmatpush1.bf16.msra.mxu0 0
        %513 = vmatprep.subr.bf16.mxu0 0
        %514 = vmatpush1.bf16.msra.mxu0 0
        %515 = vmatprep.subr.bf16.mxu0 0
        %516 = vmatpush1.bf16.msra.mxu0 0
        %517 = vmatprep.subr.bf16.mxu0 0
        %518 = vmatpush1.bf16.msra.mxu0 0
        %519 = vmatprep.subr.bf16.mxu0 0
        %520 = vmatpush1.bf16.msra.mxu0 0
        %521 = vmatprep.mubr.bf16.mxu0 0
        %522 = vmatmul.mubr.bf16.gmra.mrb[0].mxu0 %v477
        %v523 = vpop.f32.mrb[0].mxu0
        %v524 = vadd.f32 %v401, %v523
        %v525 = vpop.f32.mrb[0].mxu0
        %v526 = vadd.f32 %v401, %v525
        %v527 = vpop.f32.mrb[0].mxu0
        %v528 = vpop.f32.mrb[0].mxu0
        %529 = vdwg.mxu0
        %530 = vmatprep.subr.bf16.mxu0 0
        %531 = vmatpush1.bf16.msra.mxu0 %v450
        %532 = vmatprep.subr.bf16.mxu0 0
        %533 = vmatpush1.bf16.msra.mxu0 %v453
        %534 = vmatprep.subr.bf16.mxu0 0
        %535 = vmatpush1.bf16.msra.mxu0 %v456
        %536 = vmatprep.subr.bf16.mxu0 0
        %537 = vmatpush1.bf16.msra.mxu0 %v459
        %538 = vmatprep.subr.bf16.mxu0 0
        %539 = vmatpush1.bf16.msra.mxu0 %v487
        %540 = vmatprep.subr.bf16.mxu0 0
        %541 = vmatpush1.bf16.msra.mxu0 0
        %542 = vmatprep.subr.bf16.mxu0 0
        %543 = vmatpush1.bf16.msra.mxu0 0
        %544 = vmatprep.subr.bf16.mxu0 0
        %545 = vmatpush1.bf16.msra.mxu0 0
        %546 = vmatprep.subr.bf16.mxu0 0
        %547 = vmatpush1.bf16.msra.mxu0 0
        %548 = vmatprep.subr.bf16.mxu0 0
        %549 = vmatpush1.bf16.msra.mxu0 0
        %550 = vmatprep.subr.bf16.mxu0 0
        %551 = vmatpush1.bf16.msra.mxu0 0
        %552 = vmatprep.subr.bf16.mxu0 0
        %553 = vmatpush1.bf16.msra.mxu0 0
        %554 = vmatprep.subr.bf16.mxu0 0
        %555 = vmatpush1.bf16.msra.mxu0 0
        %556 = vmatprep.subr.bf16.mxu0 0
        %557 = vmatpush1.bf16.msra.mxu0 0
        %558 = vmatprep.subr.bf16.mxu0 0
        %559 = vmatpush1.bf16.msra.mxu0 0
        %560 = vmatprep.subr.bf16.mxu0 0
        %561 = vmatpush1.bf16.msra.mxu0 0
        %562 = vmatprep.mubr.bf16.mxu0 0
        %563 = vmatmul.mubr.bf16.gmra.mrb[0].mxu0 %v477
        %v564 = vpop.f32.mrb[0].mxu0
        %v565 = vadd.f32 %v401, %v564
        %v566 = vpop.f32.mrb[0].mxu0
        %v567 = vpop.f32.mrb[0].mxu0
        %v568 = vpop.f32.mrb[0].mxu0
        %569 = vdwg.mxu0
        %v570 = vsub.f32 0.0, %v524
        %v571 = vsub.f32 0.0, %v526
        %v572 = vsub.f32 0.0, %v565
        %v573 = vmul.f32 %v570, 1.442695
        %v574 = vpow.pop %v573
        %v575 = vmul.f32 %v571, 1.442695
        %v576 = vpow.pop %v575
        %v577 = vmul.f32 %v572, 1.442695
        %v578 = vpow.pop %v577
        %v579 = vadd.f32 %v574, 1.0
        %v580 = vadd.f32 %v576, 1.0
        %v581 = vadd.f32 %v578, 1.0
        %v582 = vrcp.pop %v579
        %v583 = vrcp.pop %v580
        %v584 = vrcp.pop %v581
        %v585 = vmul.f32 %v524, %v582
        %v586 = vmul.f32 %v526, %v583
        %v587 = vmul.f32 %v565, %v584
        %v588 = vpack.c.bf16 %v585, %v585
        %v589 = vpack.c.bf16 %v586, %v586
        %v590 = vpack.c.bf16 %v587, %v587
        %v594 = vunpack.c.l.b16 %v588
        %v595 = vunpack.c.l.b16 %v589
        %v596 = vunpack.c.l.b16 %v590
        %v597 = vpack.c.b16 %v595, %v594
        %v598 = vpack.c.b16 %v596, %v596
        %601 = vst [vmem:[%s226] sm:$0xff] %v597
        %602 = vst.msk [vmem:[%s226 + $0x8] sm:$0xf] %vm239, %v598
        %s603 = sand.u32 %s120, 1
        %s604 = scalar_lea.sflag [#allocation5], %s603
        %s605 = sand.u32 %s120, 1
        %s606 = smul.addr %s605, 12
        %s607 = scalar_lea.vmem [#allocation6], %s606
        // Predicated region
        $region37: #{tpu_custom_call.1} parent=31 // pred_check
          %p608 = pneg %p130
        $region38: #{tpu_custom_call.1} parent=31 // pred_check_branch
          %610 = sbr.rel (%p608) target = $region40
        $region39: #{tpu_custom_call.1} parent=31 // pred_region
          %s612 = ssub.s32 192, 192
          %613 = vsyncadd %s604, %s612
          %s614 = smul.addr %s24, 3
          %s615 = smul.addr %s25, 3
          %s616 = sadd.s32 %s614, %s615
          %s617 = smul.addr %s616, 64
          %s618 = scalar_lea.hbm %s3, %s617
          %s620 = sshll.u32 %s607, 4
          %s621 = int_to_ptr.vmem [resolvable:$true] %s620
          %623 = dma.vmem_to_hbm [thread:$0]  %s621, 192, %s618, %s604
        $region40: #{tpu_custom_call.1} parent=31 // pred_fallthru
          _
      $region32: #{tpu_custom_call.1} parent=5 // pred_fallthru
        _
      %p624 = scmp.le.s32.totalorder 2, %s15
      // Predicated region
      $region41: #{tpu_custom_call.1} parent=5 // pred_check
        %p625 = pneg %p624
      $region42: #{tpu_custom_call.1} parent=5 // pred_check_branch
        %627 = sbr.rel (%p625) target = $region44
      $region43: #{tpu_custom_call.1} parent=5 // pred_region
        %s628 = ssub.s32 %s15, 2
        // Predicated region
        $region45: #{tpu_custom_call.1} parent=43 // pred_check
          %p629 = pneg %p136
        $region46: #{tpu_custom_call.1} parent=43 // pred_check_branch
          %631 = sbr.rel (%p629) target = $region48
        $region47: #{tpu_custom_call.1} parent=43 // pred_region
          %s632 = sand.u32 %s121, 1
          %s633 = scalar_lea.sflag [#allocation5], %s632
          %s634 = sand.u32 %s121, 1
          %s635 = smul.addr %s634, 12
          %s636 = scalar_lea.vmem [#allocation6], %s635
          %637 = dma.done %s633, 192
        $region48: #{tpu_custom_call.1} parent=43 // pred_fallthru
          _
      $region44: #{tpu_custom_call.1} parent=5 // pred_fallthru
        _
    $region6: #{tpu_custom_call.1} parent=1 // loop_footer
      %s19 = sadd.s32 1, %s15
    $region7: #{tpu_custom_call.1} parent=1 // loop_footer_branch
      %14 = sbr.rel target = $region3
    $region8: #{tpu_custom_call.1} parent=1 // loop_exit
      _
    %638 = vsyncpa [#allocation4], 1
    %s639 = scalar_lea.sflag [#allocation4], 1
    %640 = vsyncpa %s639, 1
    %641 = vsyncpa [#allocation5], 1
    %s642 = scalar_lea.sflag [#allocation5], 1
    %643 = vsyncpa %s642, 1

</llo_original>
